<compile_context>
chip_gen: v6e
topology: v6e:2x2x1
jax: 0.10.0
libtpu: 0.0.40
codegen_flags: <defaults>
</compile_context>

<pallas_src>
import math

import jax
import jax.numpy as jnp
from jax.experimental import pallas as pl
from jax.experimental.pallas import tpu as pltpu


def _gate_multiply_kernel(x_ref, g_ref, o_ref):
    # x_ref: (tile_r, W) input tile; g_ref: (1, W) resident gate (sigmoid pre-applied).
    # Multiply promotes to the output dtype (matches torch broadcasting semantics).
    o_ref[...] = (x_ref[...] * g_ref[...]).astype(o_ref.dtype)


def _vmem_capacity_bytes():
    """Physical VMEM per core (v5e/v6e: 128 MiB, v7x: 64 MiB); conservative fallback."""
    try:
        cap = getattr(pltpu.get_tpu_info(), "vmem_capacity_bytes", None)
        if cap:
            return int(cap)
    except Exception:
        pass
    return 64 * 1024 * 1024


def _row_axis_semantics(num_tiles):
    """Use CORE_PARALLEL only where it matters (v7x: 2 TCs/chip); 'parallel' elsewhere."""
    if num_tiles >= 2:
        try:
            kind = jax.devices()[0].device_kind.lower()
        except Exception:
            kind = ""
        if "v7" in kind or "tpu7" in kind:
            core_parallel = getattr(pltpu, "CORE_PARALLEL", None)
            if core_parallel is not None:
                return (core_parallel,)
    return ("parallel",)


def dynamic_relevance_bias_mitigation(combined_input, adjustment_weights, *,
                                      pipeline_budget_bytes=None):
    """combined_input: [..., H]; adjustment_weights: [H]. Returns combined_input * sigmoid(w)."""
    orig_shape = combined_input.shape
    H = orig_shape[-1]
    x_dtype = combined_input.dtype
    w_dtype = adjustment_weights.dtype
    out_dtype = jnp.promote_types(x_dtype, w_dtype)   # torch-style result promotion
    in_item = jnp.dtype(x_dtype).itemsize
    out_item = jnp.dtype(out_dtype).itemsize

    # Gate hoisted out of the kernel: sigmoid over H scalars is trivially cheap.
    gate = jax.nn.sigmoid(adjustment_weights.astype(jnp.float32)).astype(w_dtype)

    x2d = combined_input.reshape(-1, H)
    rows = x2d.shape[0]
    if rows == 0:  # degenerate empty input
        return (x2d.astype(out_dtype) * gate.astype(out_dtype)).reshape(orig_shape)

    # VMEM budget for the pipeline buffers (2x input + 2x output double-buffers).
    vmem_cap = _vmem_capacity_bytes()
    if pipeline_budget_bytes is None:
        pipeline_budget_bytes = min(vmem_cap // 2, 48 * 1024 * 1024)
    per_elem = in_item + out_item                      # bytes/element of (in tile + out tile)

    # Sublane multiple for the narrowest dtype in play: 8 (f32), 16 (bf16), 32 (int8).
    sub = 8 * max(1, 4 // min(in_item, out_item))

    # Lane-density fold: pack `fold` consecutive rows into the lane axis so the block's last
    # dim W = lcm(H, 128) is a multiple of 128 -> unmasked full-lane stores. Contiguous
    # reshape (free); applied only when it needs no padding and the minimal tile fits VMEM.
    fold = 128 // math.gcd(H, 128)
    if fold > 1 and (rows % fold != 0
                     or 2 * sub * (H * fold) * per_elem > pipeline_budget_bytes):
        fold = 1
    W = H * fold
    rows_f = rows // fold

    xf = x2d.reshape(rows_f, W)                        # free contiguous reshape, no HBM pass
    gate_lane = (jnp.tile(gate, fold) if fold > 1 else gate).reshape(1, W)

    # Row tile: biggest multiple of `sub` whose double-buffered in+out footprint fits budget.
    tile_r = max(1, pipeline_budget_bytes // (2 * W * per_elem))
    tile_r = max(sub, (tile_r // sub) * sub)
    if tile_r >= rows_f:
        tile_r = rows_f                                # single block == full array dims
        num_tiles = 1
    else:
        num_tiles = pl.cdiv(rows_f, tile_r)            # ragged last block: Pallas masks OOB I/O

    live_bytes = 2 * tile_r * W * per_elem + 2 * W * jnp.dtype(w_dtype).itemsize
    vmem_limit = int(min(vmem_cap, live_bytes + (4 << 20)))

    out = pl.pallas_call(
        _gate_multiply_kernel,
        out_shape=jax.ShapeDtypeStruct((rows_f, W), out_dtype),
        grid_spec=pltpu.PrefetchScalarGridSpec(
            num_scalar_prefetch=0,
            grid=(num_tiles,),
            in_specs=[
                pl.BlockSpec((tile_r, W), lambda i: (i, 0)),   # x: row-tiled, pipelined
                pl.BlockSpec((1, W), lambda i: (0, 0)),        # gate: resident every step
            ],
            out_specs=pl.BlockSpec((tile_r, W), lambda i: (i, 0)),
        ),
        compiler_params=pltpu.CompilerParams(
            dimension_semantics=_row_axis_semantics(num_tiles),
            vmem_limit_bytes=vmem_limit,
        ),
    )(xf, gate_lane)

    return out.reshape(orig_shape)


if __name__ == "__main__":
    key = jax.random.PRNGKey(0)
    k_x, k_w, k_x2, k_x3 = jax.random.split(key, 4)

    # 1) Module-sized input (input_size=32): exercises the lane-fold path (W = lcm(32,128) = 128).
    batch, seq, hidden = 2, 8, 32
    x = jax.random.normal(k_x, (batch, seq, hidden), dtype=jnp.float32)
    w = jax.random.normal(k_w, (hidden,), dtype=jnp.float32)
    out = jax.block_until_ready(dynamic_relevance_bias_mitigation(x, w))
    ref = x * jax.nn.sigmoid(w)
    assert out.shape == x.shape and out.dtype == ref.dtype
    assert jnp.allclose(out, ref, atol=1e-6, rtol=1e-6)

    # 2) Non-divisor hidden + row count that defeats folding (fold -> 1, still no padding).
    x2 = jax.random.normal(k_x2, (3, 5, 48), dtype=jnp.float32)
    w2 = jax.random.normal(k_w, (48,), dtype=jnp.float32)
    out2 = jax.block_until_ready(dynamic_relevance_bias_mitigation(x2, w2))
    ref2 = x2 * jax.nn.sigmoid(w2)
    assert out2.shape == x2.shape
    assert jnp.allclose(out2, ref2, atol=1e-6, rtol=1e-6)

    # 3) Multi-tile grid with a ragged last row-block (tiny budget forces several pipeline steps).
    x3 = jax.random.normal(k_x3, (4, 100, 32), dtype=jnp.float32)
    out3 = jax.block_until_ready(
        dynamic_relevance_bias_mitigation(x3, w, pipeline_budget_bytes=64 * 1024))
    ref3 = x3 * jax.nn.sigmoid(w)
    assert jnp.allclose(out3, ref3, atol=1e-6, rtol=1e-6)

    # 4) Mixed dtype: bf16 activations * f32 weights promote to f32 (PyTorch semantics).
    xb = x.astype(jnp.bfloat16)
    outb = jax.block_until_ready(dynamic_relevance_bias_mitigation(xb, w))
    refb = xb * jax.nn.sigmoid(w)
    assert outb.dtype == refb.dtype == jnp.float32
    assert jnp.allclose(outb, refb, atol=1e-6, rtol=1e-6)

    print("KERNEL_OK")
</pallas_src>

<mosaic_0001>
module attributes {stable_mosaic.version = 11 : i64} {
  func.func @_gate_multiply_kernel(%arg0: i32, %arg1: memref<4x128xf32, #tpu.memory_space<vmem>>, %arg2: memref<1x128xf32, #tpu.memory_space<vmem>>, %arg3: memref<4x128xf32, #tpu.memory_space<vmem>>) attributes {dimension_semantics = [#tpu.dimension_semantics<parallel>], iteration_bounds = array<i64: 1>, scalar_prefetch = 0 : i64, scratch_operands = 0 : i64, tpu.core_type = #tpu.core_type<tc>, window_params = [{transform_indices = @transform_0, window_bounds = array<i64: 4, 128>}, {pipeline_mode = #tpu.pipeline_mode<synchronous>, transform_indices = @transform_1, window_bounds = array<i64: 1, 128>}, {transform_indices = @transform_2, window_bounds = array<i64: 4, 128>}]} {
    %c0 = arith.constant 0 : index
    %c0_0 = arith.constant 0 : index
    %0 = vector.load %arg1[%c0, %c0_0] : memref<4x128xf32, #tpu.memory_space<vmem>>, vector<4x128xf32>
    %c0_1 = arith.constant 0 : index
    %c0_2 = arith.constant 0 : index
    %1 = vector.load %arg2[%c0_1, %c0_2] : memref<1x128xf32, #tpu.memory_space<vmem>>, vector<1x128xf32>
    %2 = vector.broadcast %1 : vector<1x128xf32> to vector<4x128xf32>
    %3 = arith.mulf %0, %2 : vector<4x128xf32>
    %c0_3 = arith.constant 0 : index
    %c0_4 = arith.constant 0 : index
    %4 = vector.load %arg3[%c0_3, %c0_4] : memref<4x128xf32, #tpu.memory_space<vmem>>, vector<4x128xf32>
    tpu.vector_store %arg3[%c0_3, %c0_4], %3 {strides = array<i32>} : memref<4x128xf32, #tpu.memory_space<vmem>>, vector<4x128xf32>,
    return
  }
  func.func @transform_0(%arg0: i32) -> (i32, i32) {
    %c0_i32 = arith.constant 0 : i32
    %c0_i32_0 = arith.constant 0 : i32
    return %arg0, %c0_i32 : i32, i32
  }
  func.func @transform_1(%arg0: i32) -> (i32, i32) {
    %c0_i32 = arith.constant 0 : i32
    %c0_i32_0 = arith.constant 0 : i32
    %c0_i32_1 = arith.constant 0 : i32
    return %c0_i32, %c0_i32_0 : i32, i32
  }
  func.func @transform_2(%arg0: i32) -> (i32, i32) {
    %c0_i32 = arith.constant 0 : i32
    %c0_i32_0 = arith.constant 0 : i32
    return %arg0, %c0_i32 : i32, i32
  }
}

</mosaic_0001>

<llo_original>
// kernel: tpu_custom_call.1
$region0: #{tpu_custom_call.1}
  #allocation0 [shape = 'u32[]', space=smem, size = 0x4, offset = 0x4, fixed_abs, tag = 'smem constant byte address 0x4 - core index']
  #allocation1 [shape = 'u32[144,128]{1,0:T(1,128)}', space=vmem, size = 0x12000, scoped, tag = 'internal scratch']
  %s0 = inlined_call_operand.hbm [shape: f32[4,128], index: 0, kind: input, shape index: {}]
  %s1 = inlined_call_operand.vmem [shape: f32[1,128], index: 1, kind: input, shape index: {}]
  %s2 = inlined_call_operand.hbm [shape: f32[4,128], index: 2, kind: output, shape index: {}]
  %s3 = sld [smem:[#allocation0]]
  $region22: #{tpu_custom_call.1} parent=0
    _
  %s5 = ssub.s32 1, %s3
  %s6 = scalar_select 0, %s5, %s3
  $region1: #{tpu_custom_call.1} parent=0
    #allocation2 [shape = 'u8[2048]{0}', space=vmem, size = 0x800, scoped, tag = 'input window, operand 0, single buffered']
    #allocation3 [shape = 's32[1]{0}', space=sflag, size = 0x4, scoped, tag = 'scoped memory for tpu_custom_call.1']
    #allocation4 [shape = 's32[1]{0}', space=sflag, size = 0x4, scoped, tag = 'scoped memory for tpu_custom_call.1']
    #allocation5 [shape = 'u8[2048]{0}', space=vmem, size = 0x800, scoped, tag = 'output window, operand 0, single buffered']
    %7 = vsyncpa [#allocation3], 0
    %8 = vsyncpa [#allocation4], 0
    // Predicated region
    $region2: #{tpu_custom_call.1} parent=1 // pred_check
      _
    $region3: #{tpu_custom_call.1} parent=1 // pred_check_branch
      %10 = sbr.rel (0) target = $region5
    $region4: #{tpu_custom_call.1} parent=1 // pred_region
      %s12 = ssub.s32 64, 64
      %13 = vsyncadd [#allocation3], %s12
      %s15 = sshll.u32 [#allocation2], 4
      %s16 = int_to_ptr.vmem [resolvable:$true] %s15
      %18 = dma.hbm_to_vmem [thread:$0]  %s0, 64, %s16, [#allocation3]
    $region5: #{tpu_custom_call.1} parent=1 // pred_fallthru
      _
    // Predicated region
    $region6: #{tpu_custom_call.1} parent=1 // pred_check
      _
    $region7: #{tpu_custom_call.1} parent=1 // pred_check_branch
      %20 = sbr.rel (0) target = $region9
    $region8: #{tpu_custom_call.1} parent=1 // pred_region
      _
    $region9: #{tpu_custom_call.1} parent=1 // pred_fallthru
      _
    // Predicated region
    $region10: #{tpu_custom_call.1} parent=1 // pred_check
      _
    $region11: #{tpu_custom_call.1} parent=1 // pred_check_branch
      %22 = sbr.rel (0) target = $region13
    $region12: #{tpu_custom_call.1} parent=1 // pred_region
      %23 = dma.done [#allocation3], 64
    $region13: #{tpu_custom_call.1} parent=1 // pred_fallthru
      _
    %v24 = vld [vmem:[#allocation2] sm:$0xf]
    %v25 = vld [vmem:[%s1] sm:$0x1]
    %v27 = vlaneseq
    %v28 = vshrl.u32 %v27, 7
    %v29 = vsub.s32 0, %v28
    %v30 = vrot.slane %v25, %v29
    %v32 = vmul.f32 %v24, %v30
    %33 = vst [vmem:[#allocation5] sm:$0xf] %v32
    // Predicated region
    $region14: #{tpu_custom_call.1} parent=1 // pred_check
      _
    $region15: #{tpu_custom_call.1} parent=1 // pred_check_branch
      %35 = sbr.rel (0) target = $region17
    $region16: #{tpu_custom_call.1} parent=1 // pred_region
      %s37 = ssub.s32 64, 64
      %38 = vsyncadd [#allocation4], %s37
      %s40 = sshll.u32 [#allocation5], 4
      %s41 = int_to_ptr.vmem [resolvable:$true] %s40
      %43 = dma.vmem_to_hbm [thread:$0]  %s41, 64, %s2, [#allocation4]
    $region17: #{tpu_custom_call.1} parent=1 // pred_fallthru
      _
    // Predicated region
    $region18: #{tpu_custom_call.1} parent=1 // pred_check
      _
    $region19: #{tpu_custom_call.1} parent=1 // pred_check_branch
      %45 = sbr.rel (0) target = $region21
    $region20: #{tpu_custom_call.1} parent=1 // pred_region
      %46 = dma.done [#allocation4], 64
    $region21: #{tpu_custom_call.1} parent=1 // pred_fallthru
      _
    %47 = vsyncpa [#allocation3], 1
    %48 = vsyncpa [#allocation4], 1

</llo_original>
